<compile_context>
chip_gen: v7x
topology: tpu7x:2x2x1
jax: 0.10.0
libtpu: 0.0.40
codegen_flags: <defaults>
</compile_context>

<pallas_src>
import functools

import jax
import jax.numpy as jnp
from jax import lax
from jax.experimental import pallas as pl
from jax.experimental.pallas import tpu as pltpu


def _two_conv_sum_kernel(x_ref, m1_ref, m2_ref, b_ref, o_ref, *, C, HW):
    # x_ref : (R, C*HW) input block, native dtype; lane index = c*HW + h*W + w
    # m1_ref: (2, HW, 2*HW) dense iteration-1 matrix (convW o convH);
    #         m1_ref[ci][:, do*HW:(do+1)*HW] maps input channel ci -> output do
    # m2_ref: (2, HW, HW) iteration-2 matrix with the final 1x1 conv folded in
    # b_ref : (3,) SMEM scalars: [iter-1 bias ch0, iter-1 bias ch1, final bias]
    # o_ref : (R, HW) lane-dense output block

    # Channel max / mean: C-1 full-vreg maximum/add ops on 128-aligned lane
    # slices (no per-element loop, no masked stores, no scratch round trip).
    x0 = x_ref[:, 0:HW].astype(jnp.float32)
    f_max = x0
    f_sum = x0
    for c in range(1, C):
        xc = x_ref[:, c * HW:(c + 1) * HW].astype(jnp.float32)
        f_max = jnp.maximum(f_max, xc)
        f_sum = f_sum + xc
    f_mean = f_sum * (1.0 / C)

    # Iteration 1: circular convW + circular convH, both channels, one dense
    # matmul per input channel.  Lane slices below are 128-aligned (free).
    y = (jnp.dot(f_max, m1_ref[0], preferred_element_type=jnp.float32)
         + jnp.dot(f_mean, m1_ref[1], preferred_element_type=jnp.float32))
    z0 = y[:, 0:HW] + b_ref[0]
    z1 = y[:, HW:2 * HW] + b_ref[1]

    # Iteration 2 + final 1x1 conv (folded) + sigmoid, lane-dense store.
    pre = (jnp.dot(z0, m2_ref[0], preferred_element_type=jnp.float32)
           + jnp.dot(z1, m2_ref[1], preferred_element_type=jnp.float32)
           + b_ref[2])
    o_ref[...] = jax.nn.sigmoid(pre).astype(o_ref.dtype)


def _build_operands(wW, bW, wH, bH, wF, bF, H, W):
    """Host-side folding of the conv weights into dense circulant matrices.

    Layout convention: feature rows are batch elements, feature lanes are
    l = h*W + w.  Both convs are then right-multiplications:
      convW: kron(I_H, CW[ci, co]),  CW[w_in, w_out] = wW[co, ci, 0, (w_in-w_out)%W]
      convH: kron(CH[co, do], I_W),  CH[h_in, h_out] = wH[do, co, (h_in-h_out)%H, 0]
    and one iteration collapses to the dense matrix
      M1[ci, do] = sum_co kron(CH[co, do], CW[ci, co]).
    Pure function of the static weights; under jit it runs once.
    """
    f32 = jnp.float32
    wW = wW.astype(f32); bW = bW.astype(f32)
    wH = wH.astype(f32); bH = bH.astype(f32)
    wF = wF.astype(f32); bF = bF.astype(f32)
    HW = H * W

    iw = jnp.arange(W)
    # (co, ci, w_in, w_out) -> transpose to (ci, co, w_in, w_out)
    CW = wW[:, :, 0, :][..., (iw[:, None] - iw[None, :]) % W].transpose(1, 0, 2, 3)

    ih = jnp.arange(H)
    # (do, co, h_in, h_out) -> transpose to (co, do, h_in, h_out)
    CH = wH[:, :, :, 0][..., (ih[:, None] - ih[None, :]) % H].transpose(1, 0, 2, 3)

    # M1full[ci, do, h_in, w_in, h_out, w_out] = sum_co CH[co,do,h_in,h_out]*CW[ci,co,w_in,w_out]
    m1_full = jnp.einsum('adhk,cawl->cdhwkl', CH, CW).reshape(2, 2, HW, HW)
    m1 = jnp.concatenate([m1_full[:, 0], m1_full[:, 1]], axis=-1)     # (2, HW, 2*HW)

    # Fold convW bias into the per-iteration (post-convH) bias.
    s = jnp.sum(wH[:, :, :, 0], axis=2)                               # (do, co)
    b1 = bH + s @ bW                                                  # (2,)

    # Fold final 1x1 conv (+ remaining biases) into the iteration-2 matrix.
    wf = wF[0, :, 0, 0]                                               # (2,)
    m2 = wf[0] * m1_full[:, 0] + wf[1] * m1_full[:, 1]                # (2, HW, HW)
    b2 = wf[0] * b1[0] + wf[1] * b1[1] + bF[0]
    bvec = jnp.stack([b1[0], b1[1], b2]).astype(f32)                  # (3,) SMEM scalars
    return m1, m2, bvec


def two_conv_sum(x, wW, bW, wH, bH, wF, bF):
    """Pallas implementation of twoConvSum.forward.

    x : (N, C, H, W) any float dtype (kept native; reduced in f32 in-kernel)
    wW: (2, 2, 1, W), bW: (2,)
    wH: (2, 2, H, 1), bH: (2,)
    wF: (1, 2, 1, 1), bF: (1,)
    returns (N, 1, H, W) float32
    """
    N, C, H, W = x.shape
    HW = H * W

    # Rows (batch elements) per grid step: multiple of 8, capped, grid even/>=2
    # when possible so the "parallel" axis feeds both v7x TensorCores.
    R_MAX = 256
    if N <= 8:
        nb, R = 1, 8
    else:
        nb = max(2, 2 * pl.cdiv(N, 2 * R_MAX))
        R = 8 * pl.cdiv(pl.cdiv(N, nb), 8)
        nb = pl.cdiv(N, R)
    n_pad = nb * R

    xf = x.reshape(N, C * HW)                      # free reshape, lane-dense
    if n_pad != N:
        xf = jnp.pad(xf, ((0, n_pad - N), (0, 0)))

    m1, m2, bvec = _build_operands(wW, bW, wH, bH, wF, bF, H, W)

    kernel = functools.partial(_two_conv_sum_kernel, C=C, HW=HW)
    out = pl.pallas_call(
        kernel,
        out_shape=jax.ShapeDtypeStruct((n_pad, HW), jnp.float32),
        grid=(nb,),
        in_specs=[
            pl.BlockSpec((R, C * HW), lambda i: (i, 0)),
            # Weights: constant block index -> fetched once, VMEM-resident after.
            pl.BlockSpec((2, HW, 2 * HW), lambda i: (0, 0, 0)),
            pl.BlockSpec((2, HW, HW), lambda i: (0, 0, 0)),
            pl.BlockSpec(memory_space=pltpu.MemorySpace.SMEM),
        ],
        out_specs=pl.BlockSpec((R, HW), lambda i: (i, 0)),
        compiler_params=pltpu.CompilerParams(dimension_semantics=("parallel",)),
    )(xf, m1, m2, bvec)

    # (n_pad, H*W) lane-dense slab -> (N, 1, H, W); free layout plumbing.
    return out[:N].reshape(N, 1, H, W)


def ref_forward(x, wW, bW, wH, bH, wF, bF):
    """Pure-JAX reference mirroring the PyTorch forward (for verification)."""
    dn = ("NCHW", "OIHW", "NCHW")
    hp = lax.Precision.HIGHEST
    f = jnp.concatenate(
        [jnp.max(x, axis=1, keepdims=True), jnp.mean(x, axis=1, keepdims=True)],
        axis=1,
    )
    for _ in range(2):
        xe = jnp.concatenate([f, f[:, :, :, :-1]], axis=3)
        f = lax.conv_general_dilated(xe, wW, (1, 1), "VALID", dimension_numbers=dn,
                                     precision=hp) + bW.reshape(1, 2, 1, 1)
        xe = jnp.concatenate([f, f[:, :, :-1, :]], axis=2)
        f = lax.conv_general_dilated(xe, wH, (1, 1), "VALID", dimension_numbers=dn,
                                     precision=hp) + bH.reshape(1, 2, 1, 1)
    out = lax.conv_general_dilated(f, wF, (1, 1), "VALID", dimension_numbers=dn,
                                   precision=hp) + bF.reshape(1, 1, 1, 1)
    return jax.nn.sigmoid(out)


if __name__ == "__main__":
    # N = 16 -> R = 8 rows/step, a 2-step even "parallel" grid (both v7x TCs).
    N, C, H, W = 16, 4, 16, 16
    key = jax.random.PRNGKey(0)
    ks = jax.random.split(key, 7)

    x = jax.random.normal(ks[0], (N, C, H, W), jnp.float32)
    # Deterministic synthetic parameters (shapes from the module's __init__).
    wW = 0.1 * jax.random.normal(ks[1], (2, 2, 1, W), jnp.float32)
    bW = 0.1 * jax.random.normal(ks[2], (2,), jnp.float32)
    wH = 0.1 * jax.random.normal(ks[3], (2, 2, H, 1), jnp.float32)
    bH = 0.1 * jax.random.normal(ks[4], (2,), jnp.float32)
    wF = 0.5 * jax.random.normal(ks[5], (1, 2, 1, 1), jnp.float32)
    bF = 0.1 * jax.random.normal(ks[6], (1,), jnp.float32)

    out = jax.block_until_ready(two_conv_sum(x, wW, bW, wH, bH, wF, bF))
    ref = jax.block_until_ready(ref_forward(x, wW, bW, wH, bH, wF, bF))

    assert out.shape == (N, 1, H, W), out.shape
    # Tight enough to expose folding/layout bugs; margin covers default-precision
    # MXU f32 rounding differences between the fused and per-conv groupings.
    assert jnp.allclose(out, ref, atol=2e-3, rtol=2e-3), float(
        jnp.max(jnp.abs(out - ref))
    )
    print("KERNEL_OK")
</pallas_src>

<mosaic_0001>
module attributes {stable_mosaic.version = 11 : i64} {
  func.func @_two_conv_sum_kernel(%arg0: i32, %arg1: memref<8x1024xf32, #tpu.memory_space<vmem>>, %arg2: memref<2x256x512xf32, #tpu.memory_space<vmem>>, %arg3: memref<2x256x256xf32, #tpu.memory_space<vmem>>, %arg4: memref<3xf32, #tpu.memory_space<smem>>, %arg5: memref<8x256xf32, #tpu.memory_space<vmem>>) attributes {dimension_semantics = [#tpu.dimension_semantics<parallel>], iteration_bounds = array<i64: 2>, scalar_prefetch = 0 : i64, scratch_operands = 0 : i64, tpu.core_type = #tpu.core_type<tc>, window_params = [{transform_indices = @transform_0, window_bounds = array<i64: 8, 1024>}, {pipeline_mode = #tpu.pipeline_mode<synchronous>, transform_indices = @transform_1, window_bounds = array<i64: 2, 256, 512>}, {pipeline_mode = #tpu.pipeline_mode<synchronous>, transform_indices = @transform_2, window_bounds = array<i64: 2, 256, 256>}, {transform_indices = @transform_3, window_bounds = array<i64: 3>}, {transform_indices = @transform_4, window_bounds = array<i64: 8, 256>}]} {
    %c0 = arith.constant 0 : index
    %c0_0 = arith.constant 0 : index
    %0 = vector.load %arg1[%c0, %c0_0] : memref<8x1024xf32, #tpu.memory_space<vmem>>, vector<8x256xf32>
    %c0_1 = arith.constant 0 : index
    %c256 = arith.constant 256 : index
    %1 = vector.load %arg1[%c0_1, %c256] : memref<8x1024xf32, #tpu.memory_space<vmem>>, vector<8x256xf32>
    %2 = arith.maximumf %0, %1 : vector<8x256xf32>
    %3 = arith.addf %0, %1 : vector<8x256xf32>
    %c0_2 = arith.constant 0 : index
    %c512 = arith.constant 512 : index
    %4 = vector.load %arg1[%c0_2, %c512] : memref<8x1024xf32, #tpu.memory_space<vmem>>, vector<8x256xf32>
    %5 = arith.maximumf %2, %4 : vector<8x256xf32>
    %6 = arith.addf %3, %4 : vector<8x256xf32>
    %c0_3 = arith.constant 0 : index
    %c768 = arith.constant 768 : index
    %7 = vector.load %arg1[%c0_3, %c768] : memref<8x1024xf32, #tpu.memory_space<vmem>>, vector<8x256xf32>
    %8 = arith.maximumf %5, %7 : vector<8x256xf32>
    %9 = arith.addf %6, %7 : vector<8x256xf32>
    %cst = arith.constant 2.500000e-01 : f32
    %10 = vector.broadcast %cst : f32 to vector<8x256xf32>
    %11 = arith.mulf %9, %10 : vector<8x256xf32>
    %c0_4 = arith.constant 0 : index
    %c0_5 = arith.constant 0 : index
    %c0_6 = arith.constant 0 : index
    %12 = vector.load %arg2[%c0_4, %c0_5, %c0_6] : memref<2x256x512xf32, #tpu.memory_space<vmem>>, vector<1x256x512xf32>
    %13 = vector.shape_cast %12 : vector<1x256x512xf32> to vector<256x512xf32>
    %cst_7 = arith.constant dense<0.000000e+00> : vector<8x512xf32>
    %14 = tpu.matmul %8, %13, %cst_7 {dimension_numbers = #tpu.dot_dimension_numbers<[1], [0], [0], [1], [0, 0, 1, 1], [], []>} : vector<8x256xf32>, vector<256x512xf32>, vector<8x512xf32> -> vector<8x512xf32>
    %c1 = arith.constant 1 : index
    %c0_8 = arith.constant 0 : index
    %c0_9 = arith.constant 0 : index
    %15 = vector.load %arg2[%c1, %c0_8, %c0_9] : memref<2x256x512xf32, #tpu.memory_space<vmem>>, vector<1x256x512xf32>
    %16 = vector.shape_cast %15 : vector<1x256x512xf32> to vector<256x512xf32>
    %cst_10 = arith.constant dense<0.000000e+00> : vector<8x512xf32>
    %17 = tpu.matmul %11, %16, %cst_10 {dimension_numbers = #tpu.dot_dimension_numbers<[1], [0], [0], [1], [0, 0, 1, 1], [], []>} : vector<8x256xf32>, vector<256x512xf32>, vector<8x512xf32> -> vector<8x512xf32>
    %18 = arith.addf %14, %17 : vector<8x512xf32>
    %19 = vector.extract_strided_slice %18 {offsets = [0, 0], sizes = [8, 256], strides = [1, 1]} : vector<8x512xf32> to vector<8x256xf32>
    %c0_11 = arith.constant 0 : index
    %20 = memref.load %arg4[%c0_11] : memref<3xf32, #tpu.memory_space<smem>>
    %21 = vector.broadcast %20 : f32 to vector<8x256xf32>
    %22 = arith.addf %19, %21 : vector<8x256xf32>
    %23 = vector.extract_strided_slice %18 {offsets = [0, 256], sizes = [8, 256], strides = [1, 1]} : vector<8x512xf32> to vector<8x256xf32>
    %c1_12 = arith.constant 1 : index
    %24 = memref.load %arg4[%c1_12] : memref<3xf32, #tpu.memory_space<smem>>
    %25 = vector.broadcast %24 : f32 to vector<8x256xf32>
    %26 = arith.addf %23, %25 : vector<8x256xf32>
    %c0_13 = arith.constant 0 : index
    %c0_14 = arith.constant 0 : index
    %c0_15 = arith.constant 0 : index
    %27 = vector.load %arg3[%c0_13, %c0_14, %c0_15] : memref<2x256x256xf32, #tpu.memory_space<vmem>>, vector<1x256x256xf32>
    %28 = vector.shape_cast %27 : vector<1x256x256xf32> to vector<256x256xf32>
    %cst_16 = arith.constant dense<0.000000e+00> : vector<8x256xf32>
    %29 = tpu.matmul %22, %28, %cst_16 {dimension_numbers = #tpu.dot_dimension_numbers<[1], [0], [0], [1], [0, 0, 1, 1], [], []>} : vector<8x256xf32>, vector<256x256xf32>, vector<8x256xf32> -> vector<8x256xf32>
    %c1_17 = arith.constant 1 : index
    %c0_18 = arith.constant 0 : index
    %c0_19 = arith.constant 0 : index
    %30 = vector.load %arg3[%c1_17, %c0_18, %c0_19] : memref<2x256x256xf32, #tpu.memory_space<vmem>>, vector<1x256x256xf32>
    %31 = vector.shape_cast %30 : vector<1x256x256xf32> to vector<256x256xf32>
    %cst_20 = arith.constant dense<0.000000e+00> : vector<8x256xf32>
    %32 = tpu.matmul %26, %31, %cst_20 {dimension_numbers = #tpu.dot_dimension_numbers<[1], [0], [0], [1], [0, 0, 1, 1], [], []>} : vector<8x256xf32>, vector<256x256xf32>, vector<8x256xf32> -> vector<8x256xf32>
    %33 = arith.addf %29, %32 : vector<8x256xf32>
    %c2 = arith.constant 2 : index
    %34 = memref.load %arg4[%c2] : memref<3xf32, #tpu.memory_space<smem>>
    %35 = vector.broadcast %34 : f32 to vector<8x256xf32>
    %36 = arith.addf %33, %35 : vector<8x256xf32>
    %37 = arith.negf %36 : vector<8x256xf32>
    %38 = math.exp %37 : vector<8x256xf32>
    %cst_21 = arith.constant 1.000000e+00 : f32
    %39 = vector.broadcast %cst_21 : f32 to vector<8x256xf32>
    %40 = arith.addf %39, %38 : vector<8x256xf32>
    %41 = arith.divf %39, %40 : vector<8x256xf32>
    %c0_22 = arith.constant 0 : index
    %c0_23 = arith.constant 0 : index
    %42 = vector.load %arg5[%c0_22, %c0_23] : memref<8x256xf32, #tpu.memory_space<vmem>>, vector<8x256xf32>
    tpu.vector_store %arg5[%c0_22, %c0_23], %41 {strides = array<i32>} : memref<8x256xf32, #tpu.memory_space<vmem>>, vector<8x256xf32>,
    return
  }
  func.func @transform_0(%arg0: i32) -> (i32, i32) {
    %c0_i32 = arith.constant 0 : i32
    %c0_i32_0 = arith.constant 0 : i32
    return %arg0, %c0_i32 : i32, i32
  }
  func.func @transform_1(%arg0: i32) -> (i32, i32, i32) {
    %c0_i32 = arith.constant 0 : i32
    %c0_i32_0 = arith.constant 0 : i32
    %c0_i32_1 = arith.constant 0 : i32
    %c0_i32_2 = arith.constant 0 : i32
    return %c0_i32, %c0_i32_0, %c0_i32_1 : i32, i32, i32
  }
  func.func @transform_2(%arg0: i32) -> (i32, i32, i32) {
    %c0_i32 = arith.constant 0 : i32
    %c0_i32_0 = arith.constant 0 : i32
    %c0_i32_1 = arith.constant 0 : i32
    %c0_i32_2 = arith.constant 0 : i32
    return %c0_i32, %c0_i32_0, %c0_i32_1 : i32, i32, i32
  }
  func.func @transform_3(%arg0: i32) -> i32 {
    %c0_i32 = arith.constant 0 : i32
    %c0_i32_0 = arith.constant 0 : i32
    return %c0_i32 : i32
  }
  func.func @transform_4(%arg0: i32) -> (i32, i32) {
    %c0_i32 = arith.constant 0 : i32
    %c0_i32_0 = arith.constant 0 : i32
    return %arg0, %c0_i32 : i32, i32
  }
}

</mosaic_0001>

<llo_original>
// kernel: tpu_custom_call.1
$region0: #{tpu_custom_call.1}
  #allocation0 [shape = 'u32[]', space=smem, size = 0x4, offset = 0x4, fixed_abs, tag = 'smem constant byte address 0x4 - core index']
  #allocation1 [shape = 'u32[144,128]{1,0:T(1,128)}', space=vmem, size = 0x12000, scoped, tag = 'internal scratch']
  %s0 = inlined_call_operand.hbm [shape: f32[16,1024], index: 0, kind: input, shape index: {}]
  %s1 = inlined_call_operand.hbm [shape: f32[2,256,512], index: 1, kind: input, shape index: {}]
  %s2 = inlined_call_operand.hbm [shape: f32[2,256,256], index: 2, kind: input, shape index: {}]
  %s3 = inlined_call_operand.vmem [shape: f32[3], index: 3, kind: input, shape index: {}]
  %s4 = inlined_call_operand.hbm [shape: f32[16,256], index: 4, kind: output, shape index: {}]
  %s5 = sld [smem:[#allocation0]]
  $region65: #{tpu_custom_call.1} parent=0
    _
  %s7 = ssub.s32 1, %s5
  %s8 = scalar_select 0, %s7, %s5
  $region1: #{tpu_custom_call.1} parent=0
    #allocation2 [shape = 'u8[65536]{0}', space=vmem, size = 0x10000, scoped, tag = 'input window, operand 0']
    #allocation3 [shape = 's32[2]{0}', space=sflag, size = 0x8, scoped, tag = 'scoped memory for tpu_custom_call.1']
    #allocation4 [shape = 's32[2]{0}', space=sflag, size = 0x8, scoped, tag = 'scoped memory for tpu_custom_call.1']
    #allocation5 [shape = 's32[2]{0}', space=sflag, size = 0x8, scoped, tag = 'scoped memory for tpu_custom_call.1']
    #allocation6 [shape = 'u8[1048576]{0}', space=vmem, size = 0x100000, scoped, tag = 'input window, operand 1, single buffered']
    #allocation7 [shape = 's32[1]{0}', space=sflag, size = 0x4, scoped, tag = 'scoped memory for tpu_custom_call.1']
    #allocation8 [shape = 'u8[524288]{0}', space=vmem, size = 0x80000, scoped, tag = 'input window, operand 2, single buffered']
    #allocation9 [shape = 'u8[512]{0}', space=smem, size = 0x200, scoped, tag = 'input window, operand 3, single buffered']
    #allocation10 [shape = 'u8[16384]{0}', space=vmem, size = 0x4000, scoped, tag = 'output window, operand 0']
    %9 = vsyncpa [#allocation3], 0
    %s10 = scalar_lea.sflag [#allocation3], 1
    %11 = vsyncpa %s10, 0
    %12 = vsyncpa [#allocation7], 0
    %13 = vsyncpa [#allocation5], 0
    %14 = vsyncpa [#allocation4], 0
    %s15 = scalar_lea.sflag [#allocation4], 1
    %16 = vsyncpa %s15, 0
    loop: start=0, step=1, limit=4
    $region2: #{tpu_custom_call.1} parent=1 // loop_pre_header
      _
    $region3: #{tpu_custom_call.1} parent=1 // loop_header
      %s18 = sphi 0, %s22
      %p19 = scmp.ge.s32.totalorder %s18, 4
      %s28 = sphi 0, %s30
      %s31 = sphi 0, %s28
      %s32 = sphi 0, %s31
      %s48 = sphi 0, %s32
      %s52 = sphi 0, %s52
      %s54 = sphi 0, %s52
      %s55 = sphi 0, %s54
      %s69 = sphi 0, %s55
      %s73 = sphi 0, %s73
      %s75 = sphi 0, %s73
      %s76 = sphi 0, %s75
      %s90 = sphi 0, %s76
      %s94 = sphi 0, %s94
      %s96 = sphi 0, %s94
      %s97 = sphi 0, %s96
      %s111 = sphi 0, %s97
      %s117 = sphi 0, %s119
      %s120 = sphi 0, %s117
      %s121 = sphi 0, %s120
      %s137 = sphi 0, %s121
    $region4: #{tpu_custom_call.1} parent=1 // loop_header_branch
      %21 = sbr.rel (%p19) target = $region8
    $region5: #{tpu_custom_call.1} parent=1 // loop_body
      %s23 = ssub.s32 %s18, 1
      %s24 = ssub.s32 %s18, 2
      %s25 = sadd.s32 %s18, 1
      %s26 = ssub.s32 %s18, %s25
      %p27 = scmp.eq.s32.totalorder %s26, 0
      %s29 = sadd.s32 %s28, 1
      %s30 = scalar_select %p27, %s28, %s29
      %p33 = pneg %p27
      %p34 = scmp.eq.s32.totalorder %s18, 1
      %p35 = por %p33, %p34
      %p36 = scmp.ne.s32.totalorder %s28, %s31
      %p37 = scmp.eq.s32.totalorder %s18, 0
      %p38 = por %p36, %p37
      %p39 = scmp.ne.s32.totalorder %s28, %s31
      %p40 = scmp.eq.s32.totalorder %s23, 1
      %p41 = por %p39, %p40
      %p42 = scmp.ne.s32.totalorder %s31, %s32
      %p43 = scmp.eq.s32.totalorder %s23, 0
      %p44 = por %p42, %p43
      %p45 = scmp.ne.s32.totalorder %s31, %s32
      %p46 = scmp.eq.s32.totalorder %s24, 1
      %p47 = por %p45, %p46
      %p49 = scmp.ne.s32.totalorder %s32, %s48
      %p50 = scmp.eq.s32.totalorder %s24, 0
      %p51 = por %p49, %p50
      %s53 = sadd.s32 %s52, 1
      %p56 = scmp.eq.s32.totalorder %s18, 1
      %p57 = scmp.ne.s32.totalorder %s52, %s54
      %p58 = scmp.eq.s32.totalorder %s18, 0
      %p59 = por %p57, %p58
      %p60 = scmp.ne.s32.totalorder %s52, %s54
      %p61 = scmp.eq.s32.totalorder %s23, 1
      %p62 = por %p60, %p61
      %p63 = scmp.ne.s32.totalorder %s54, %s55
      %p64 = scmp.eq.s32.totalorder %s23, 0
      %p65 = por %p63, %p64
      %p66 = scmp.ne.s32.totalorder %s54, %s55
      %p67 = scmp.eq.s32.totalorder %s24, 1
      %p68 = por %p66, %p67
      %p70 = scmp.ne.s32.totalorder %s55, %s69
      %p71 = scmp.eq.s32.totalorder %s24, 0
      %p72 = por %p70, %p71
      %s74 = sadd.s32 %s73, 1
      %p77 = scmp.eq.s32.totalorder %s18, 1
      %p78 = scmp.ne.s32.totalorder %s73, %s75
      %p79 = scmp.eq.s32.totalorder %s18, 0
      %p80 = por %p78, %p79
      %p81 = scmp.ne.s32.totalorder %s73, %s75
      %p82 = scmp.eq.s32.totalorder %s23, 1
      %p83 = por %p81, %p82
      %p84 = scmp.ne.s32.totalorder %s75, %s76
      %p85 = scmp.eq.s32.totalorder %s23, 0
      %p86 = por %p84, %p85
      %p87 = scmp.ne.s32.totalorder %s75, %s76
      %p88 = scmp.eq.s32.totalorder %s24, 1
      %p89 = por %p87, %p88
      %p91 = scmp.ne.s32.totalorder %s76, %s90
      %p92 = scmp.eq.s32.totalorder %s24, 0
      %p93 = por %p91, %p92
      %s95 = sadd.s32 %s94, 1
      %p98 = scmp.eq.s32.totalorder %s18, 1
      %p99 = scmp.ne.s32.totalorder %s94, %s96
      %p100 = scmp.eq.s32.totalorder %s18, 0
      %p101 = por %p99, %p100
      %p102 = scmp.ne.s32.totalorder %s94, %s96
      %p103 = scmp.eq.s32.totalorder %s23, 1
      %p104 = por %p102, %p103
      %p105 = scmp.ne.s32.totalorder %s96, %s97
      %p106 = scmp.eq.s32.totalorder %s23, 0
      %p107 = por %p105, %p106
      %p108 = scmp.ne.s32.totalorder %s96, %s97
      %p109 = scmp.eq.s32.totalorder %s24, 1
      %p110 = por %p108, %p109
      %p112 = scmp.ne.s32.totalorder %s97, %s111
      %p113 = scmp.eq.s32.totalorder %s24, 0
      %p114 = por %p112, %p113
      %s115 = ssub.s32 %s18, %s25
      %p116 = scmp.eq.s32.totalorder %s115, 0
      %s118 = sadd.s32 %s117, 1
      %s119 = scalar_select %p116, %s117, %s118
      %p122 = pneg %p116
      %p123 = scmp.eq.s32.totalorder %s18, 1
      %p124 = por %p122, %p123
      %p125 = scmp.ne.s32.totalorder %s117, %s120
      %p126 = scmp.eq.s32.totalorder %s18, 0
      %p127 = por %p125, %p126
      %p128 = scmp.ne.s32.totalorder %s117, %s120
      %p129 = scmp.eq.s32.totalorder %s23, 1
      %p130 = por %p128, %p129
      %p131 = scmp.ne.s32.totalorder %s120, %s121
      %p132 = scmp.eq.s32.totalorder %s23, 0
      %p133 = por %p131, %p132
      %p134 = scmp.ne.s32.totalorder %s120, %s121
      %p135 = scmp.eq.s32.totalorder %s24, 1
      %p136 = por %p134, %p135
      %p138 = scmp.ne.s32.totalorder %s121, %s137
      %p139 = scmp.eq.s32.totalorder %s24, 0
      %p140 = por %p138, %p139
      %p141 = scmp.le.s32.totalorder 1, %s18
      %p142 = scmp.lt.s32.totalorder %s18, 3
      %p143 = pnand %p141, %p142
      %p144 = pneg %p143
      // Predicated region
      $region9: #{tpu_custom_call.1} parent=5 // pred_check
        _
      $region10: #{tpu_custom_call.1} parent=5 // pred_check_branch
        %146 = sbr.rel (%p143) target = $region12
      $region11: #{tpu_custom_call.1} parent=5 // pred_region
        %s147 = ssub.s32 %s18, 1
        // Predicated region
        $region13: #{tpu_custom_call.1} parent=11 // pred_check
          %p148 = pneg %p65
        $region14: #{tpu_custom_call.1} parent=11 // pred_check_branch
          %150 = sbr.rel (%p148) target = $region16
        $region15: #{tpu_custom_call.1} parent=11 // pred_region
          %s152 = ssub.s32 32768, 32768
          %153 = vsyncadd [#allocation7], %s152
          %s154 = sshll.u32 [#allocation6], 4
          %s155 = int_to_ptr.vmem [resolvable:$true] %s154
          %160 = dma.hbm_to_vmem [thread:$0]  %s1, 32768, %s155, [#allocation7], 512, 512, 32
        $region16: #{tpu_custom_call.1} parent=11 // pred_fallthru
          _
        // Predicated region
        $region17: #{tpu_custom_call.1} parent=11 // pred_check
          %p161 = pneg %p86
        $region18: #{tpu_custom_call.1} parent=11 // pred_check_branch
          %163 = sbr.rel (%p161) target = $region20
        $region19: #{tpu_custom_call.1} parent=11 // pred_region
          %s165 = ssub.s32 16384, 16384
          %166 = vsyncadd [#allocation7], %s165
          %s167 = sshll.u32 [#allocation8], 4
          %s168 = int_to_ptr.vmem [resolvable:$true] %s167
          %173 = dma.hbm_to_vmem [thread:$0]  %s2, 16384, %s168, [#allocation7], 256, 256, 16
        $region20: #{tpu_custom_call.1} parent=11 // pred_fallthru
          _
        // Predicated region
        $region21: #{tpu_custom_call.1} parent=11 // pred_check
          %p174 = pneg %p107
        $region22: #{tpu_custom_call.1} parent=11 // pred_check_branch
          %176 = sbr.rel (%p174) target = $region24
        $region23: #{tpu_custom_call.1} parent=11 // pred_region
          %s178 = ssub.s32 16, 16
          %179 = vsyncadd [#allocation5], %s178
          %s181 = sshll.u32 %s3, 4
          %s182 = int_to_ptr.vmem [resolvable:$true] %s181
          %184 = dma.vmem_to_smem %s182, 16, [#allocation9], [#allocation5]
        $region24: #{tpu_custom_call.1} parent=11 // pred_fallthru
          _
      $region12: #{tpu_custom_call.1} parent=5 // pred_fallthru
        _
      %p185 = scmp.lt.s32.totalorder %s18, 2
      // Predicated region
      $region25: #{tpu_custom_call.1} parent=5 // pred_check
        %p186 = pneg %p185
      $region26: #{tpu_custom_call.1} parent=5 // pred_check_branch
        %188 = sbr.rel (%p186) target = $region28
      $region27: #{tpu_custom_call.1} parent=5 // pred_region
        // Predicated region
        $region29: #{tpu_custom_call.1} parent=27 // pred_check
          %p189 = pneg %p38
        $region30: #{tpu_custom_call.1} parent=27 // pred_check_branch
          %191 = sbr.rel (%p189) target = $region32
        $region31: #{tpu_custom_call.1} parent=27 // pred_region
          %s192 = sand.u32 %s28, 1
          %s193 = scalar_lea.sflag [#allocation3], %s192
          %s194 = sand.u32 %s28, 1
          %s195 = smul.addr %s194, 64
          %s196 = scalar_lea.vmem [#allocation2], %s195
          %s198 = ssub.s32 1024, 1024
          %199 = vsyncadd %s193, %s198
          %s200 = smul.addr %s18, 8
          %s201 = smul.addr %s200, 128
          %s202 = scalar_lea.hbm %s0, %s201
          %s204 = sshll.u32 %s196, 4
          %s205 = int_to_ptr.vmem [resolvable:$true] %s204
          %207 = dma.hbm_to_vmem [thread:$0]  %s202, 1024, %s205, %s193
        $region32: #{tpu_custom_call.1} parent=27 // pred_fallthru
          _
      $region28: #{tpu_custom_call.1} parent=5 // pred_fallthru
        _
      %p208 = scmp.le.s32.totalorder 1, %s18
      %p209 = scmp.lt.s32.totalorder %s18, 3
      %p210 = pnand %p208, %p209
      %p211 = pneg %p210
      // Predicated region
      $region33: #{tpu_custom_call.1} parent=5 // pred_check
        _
      $region34: #{tpu_custom_call.1} parent=5 // pred_check_branch
        %213 = sbr.rel (%p210) target = $region36
      $region35: #{tpu_custom_call.1} parent=5 // pred_region
        %s214 = ssub.s32 %s18, 1
        %s215 = sand.u32 %s31, 1
        %s216 = scalar_lea.sflag [#allocation3], %s215
        %s217 = sand.u32 %s31, 1
        %s218 = smul.addr %s217, 64
        %s219 = scalar_lea.vmem [#allocation2], %s218
        // Predicated region
        $region37: #{tpu_custom_call.1} parent=35 // pred_check
          %p220 = pneg %p44
        $region38: #{tpu_custom_call.1} parent=35 // pred_check_branch
          %222 = sbr.rel (%p220) target = $region40
        $region39: #{tpu_custom_call.1} parent=35 // pred_region
          %223 = dma.done %s216, 1024
        $region40: #{tpu_custom_call.1} parent=35 // pred_fallthru
          _
        // Predicated region
        $region41: #{tpu_custom_call.1} parent=35 // pred_check
          %p224 = pneg %p65
        $region42: #{tpu_custom_call.1} parent=35 // pred_check_branch
          %226 = sbr.rel (%p224) target = $region44
        $region43: #{tpu_custom_call.1} parent=35 // pred_region
          %227 = dma.done [#allocation7], 32768
        $region44: #{tpu_custom_call.1} parent=35 // pred_fallthru
          _
        // Predicated region
        $region45: #{tpu_custom_call.1} parent=35 // pred_check
          %p228 = pneg %p86
        $region46: #{tpu_custom_call.1} parent=35 // pred_check_branch
          %230 = sbr.rel (%p228) target = $region48
        $region47: #{tpu_custom_call.1} parent=35 // pred_region
          %231 = dma.done [#allocation7], 16384
        $region48: #{tpu_custom_call.1} parent=35 // pred_fallthru
          _
        // Predicated region
        $region49: #{tpu_custom_call.1} parent=35 // pred_check
          %p232 = pneg %p107
        $region50: #{tpu_custom_call.1} parent=35 // pred_check_branch
          %234 = sbr.rel (%p232) target = $region52
        $region51: #{tpu_custom_call.1} parent=35 // pred_region
          %235 = dma.done [#allocation5], 16
        $region52: #{tpu_custom_call.1} parent=35 // pred_fallthru
          _
        %236 = sfence
        %s237 = sand.u32 %s31, 1
        %s238 = scalar_lea.sflag [#allocation3], %s237
        %s239 = sand.u32 %s31, 1
        %s240 = smul.addr %s239, 64
        %s241 = scalar_lea.vmem [#allocation2], %s240
        %p242 = pneg %p44
        %p243 = pneg %p41
        %p244 = pneg %p65
        %p245 = pneg %p62
        %p246 = pneg %p86
        %p247 = pneg %p83
        %p248 = pneg %p107
        %p249 = pneg %p104
        %p250 = pneg %p133
        %p251 = pneg %p130
        %s252 = sand.u32 %s120, 1
        %s253 = scalar_lea.sflag [#allocation4], %s252
        %s254 = sand.u32 %s120, 1
        %s255 = smul.addr %s254, 16
        %s256 = scalar_lea.vmem [#allocation10], %s255
        %v257 = vld [vmem:[%s219] sm:$0xff]
        %v258 = vld [vmem:[%s219 + $0x8] sm:$0xff]
        %v259 = vld [vmem:[%s219 + $0x10] sm:$0xff]
        %v260 = vld [vmem:[%s219 + $0x18] sm:$0xff]
        %v261 = vmax.f32 %v257, %v259
        %v262 = vmax.f32 %v258, %v260
        %v263 = vadd.f32 %v257, %v259
        %v264 = vadd.f32 %v258, %v260
        %v265 = vld [vmem:[%s219 + $0x20] sm:$0xff]
        %v266 = vld [vmem:[%s219 + $0x28] sm:$0xff]
        %v267 = vmax.f32 %v261, %v265
        %v268 = vmax.f32 %v262, %v266
        %v269 = vadd.f32 %v263, %v265
        %v270 = vadd.f32 %v264, %v266
        %v271 = vld [vmem:[%s219 + $0x30] sm:$0xff]
        %v272 = vld [vmem:[%s219 + $0x38] sm:$0xff]
        %v273 = vmax.f32 %v267, %v271
        %v274 = vmax.f32 %v268, %v272
        %v275 = vadd.f32 %v269, %v271
        %v276 = vadd.f32 %v270, %v272
        %v277 = vmul.f32 %v275, 0.25
        %v278 = vmul.f32 %v276, 0.25
        %v279 = vld [vmem:[#allocation6] sm:$0xff]
        %v280 = vld [vmem:[#allocation6 + $0x8] sm:$0xff]
        %v281 = vld [vmem:[#allocation6 + $0x10] sm:$0xff]
        %v282 = vld [vmem:[#allocation6 + $0x18] sm:$0xff]
        %v283 = vld [vmem:[#allocation6 + $0x20] sm:$0xff]
        %v284 = vld [vmem:[#allocation6 + $0x28] sm:$0xff]
        %v285 = vld [vmem:[#allocation6 + $0x30] sm:$0xff]
        %v286 = vld [vmem:[#allocation6 + $0x38] sm:$0xff]
        %v287 = vld [vmem:[#allocation6 + $0x40] sm:$0xff]
        %v288 = vld [vmem:[#allocation6 + $0x48] sm:$0xff]
        %v289 = vld [vmem:[#allocation6 + $0x50] sm:$0xff]
        %v290 = vld [vmem:[#allocation6 + $0x58] sm:$0xff]
        %v291 = vld [vmem:[#allocation6 + $0x60] sm:$0xff]
        %v292 = vld [vmem:[#allocation6 + $0x68] sm:$0xff]
        %v293 = vld [vmem:[#allocation6 + $0x70] sm:$0xff]
        %v294 = vld [vmem:[#allocation6 + $0x78] sm:$0xff]
        %v295 = vld [vmem:[#allocation6 + $0x80] sm:$0xff]
        %v296 = vld [vmem:[#allocation6 + $0x88] sm:$0xff]
        %v297 = vld [vmem:[#allocation6 + $0x90] sm:$0xff]
        %v298 = vld [vmem:[#allocation6 + $0x98] sm:$0xff]
        %v299 = vld [vmem:[#allocation6 + $0xa0] sm:$0xff]
        %v300 = vld [vmem:[#allocation6 + $0xa8] sm:$0xff]
        %v301 = vld [vmem:[#allocation6 + $0xb0] sm:$0xff]
        %v302 = vld [vmem:[#allocation6 + $0xb8] sm:$0xff]
        %v303 = vld [vmem:[#allocation6 + $0xc0] sm:$0xff]
        %v304 = vld [vmem:[#allocation6 + $0xc8] sm:$0xff]
        %v305 = vld [vmem:[#allocation6 + $0xd0] sm:$0xff]
        %v306 = vld [vmem:[#allocation6 + $0xd8] sm:$0xff]
        %v307 = vld [vmem:[#allocation6 + $0xe0] sm:$0xff]
        %v308 = vld [vmem:[#allocation6 + $0xe8] sm:$0xff]
        %v309 = vld [vmem:[#allocation6 + $0xf0] sm:$0xff]
        %v310 = vld [vmem:[#allocation6 + $0xf8] sm:$0xff]
        %v311 = vld [vmem:[#allocation6 + $0x100] sm:$0xff]
        %v312 = vld [vmem:[#allocation6 + $0x108] sm:$0xff]
        %v313 = vld [vmem:[#allocation6 + $0x110] sm:$0xff]
        %v314 = vld [vmem:[#allocation6 + $0x118] sm:$0xff]
        %v315 = vld [vmem:[#allocation6 + $0x120] sm:$0xff]
        %v316 = vld [vmem:[#allocation6 + $0x128] sm:$0xff]
        %v317 = vld [vmem:[#allocation6 + $0x130] sm:$0xff]
        %v318 = vld [vmem:[#allocation6 + $0x138] sm:$0xff]
        %v319 = vld [vmem:[#allocation6 + $0x140] sm:$0xff]
        %v320 = vld [vmem:[#allocation6 + $0x148] sm:$0xff]
        %v321 = vld [vmem:[#allocation6 + $0x150] sm:$0xff]
        %v322 = vld [vmem:[#allocation6 + $0x158] sm:$0xff]
        %v323 = vld [vmem:[#allocation6 + $0x160] sm:$0xff]
        %v324 = vld [vmem:[#allocation6 + $0x168] sm:$0xff]
        %v325 = vld [vmem:[#allocation6 + $0x170] sm:$0xff]
        %v326 = vld [vmem:[#allocation6 + $0x178] sm:$0xff]
        %v327 = vld [vmem:[#allocation6 + $0x180] sm:$0xff]
        %v328 = vld [vmem:[#allocation6 + $0x188] sm:$0xff]
        %v329 = vld [vmem:[#allocation6 + $0x190] sm:$0xff]
        %v330 = vld [vmem:[#allocation6 + $0x198] sm:$0xff]
        %v331 = vld [vmem:[#allocation6 + $0x1a0] sm:$0xff]
        %v332 = vld [vmem:[#allocation6 + $0x1a8] sm:$0xff]
        %v333 = vld [vmem:[#allocation6 + $0x1b0] sm:$0xff]
        %v334 = vld [vmem:[#allocation6 + $0x1b8] sm:$0xff]
        %v335 = vld [vmem:[#allocation6 + $0x1c0] sm:$0xff]
        %v336 = vld [vmem:[#allocation6 + $0x1c8] sm:$0xff]
        %v337 = vld [vmem:[#allocation6 + $0x1d0] sm:$0xff]
        %v338 = vld [vmem:[#allocation6 + $0x1d8] sm:$0xff]
        %v339 = vld [vmem:[#allocation6 + $0x1e0] sm:$0xff]
        %v340 = vld [vmem:[#allocation6 + $0x1e8] sm:$0xff]
        %v341 = vld [vmem:[#allocation6 + $0x1f0] sm:$0xff]
        %v342 = vld [vmem:[#allocation6 + $0x1f8] sm:$0xff]
        %v343 = vld [vmem:[#allocation6 + $0x200] sm:$0xff]
        %v344 = vld [vmem:[#allocation6 + $0x208] sm:$0xff]
        %v345 = vld [vmem:[#allocation6 + $0x210] sm:$0xff]
        %v346 = vld [vmem:[#allocation6 + $0x218] sm:$0xff]
        %v347 = vld [vmem:[#allocation6 + $0x220] sm:$0xff]
        %v348 = vld [vmem:[#allocation6 + $0x228] sm:$0xff]
        %v349 = vld [vmem:[#allocation6 + $0x230] sm:$0xff]
        %v350 = vld [vmem:[#allocation6 + $0x238] sm:$0xff]
        %v351 = vld [vmem:[#allocation6 + $0x240] sm:$0xff]
        %v352 = vld [vmem:[#allocation6 + $0x248] sm:$0xff]
        %v353 = vld [vmem:[#allocation6 + $0x250] sm:$0xff]
        %v354 = vld [vmem:[#allocation6 + $0x258] sm:$0xff]
        %v355 = vld [vmem:[#allocation6 + $0x260] sm:$0xff]
        %v356 = vld [vmem:[#allocation6 + $0x268] sm:$0xff]
        %v357 = vld [vmem:[#allocation6 + $0x270] sm:$0xff]
        %v358 = vld [vmem:[#allocation6 + $0x278] sm:$0xff]
        %v359 = vld [vmem:[#allocation6 + $0x280] sm:$0xff]
        %v360 = vld [vmem:[#allocation6 + $0x288] sm:$0xff]
        %v361 = vld [vmem:[#allocation6 + $0x290] sm:$0xff]
        %v362 = vld [vmem:[#allocation6 + $0x298] sm:$0xff]
        %v363 = vld [vmem:[#allocation6 + $0x2a0] sm:$0xff]
        %v364 = vld [vmem:[#allocation6 + $0x2a8] sm:$0xff]
        %v365 = vld [vmem:[#allocation6 + $0x2b0] sm:$0xff]
        %v366 = vld [vmem:[#allocation6 + $0x2b8] sm:$0xff]
        %v367 = vld [vmem:[#allocation6 + $0x2c0] sm:$0xff]
        %v368 = vld [vmem:[#allocation6 + $0x2c8] sm:$0xff]
        %v369 = vld [vmem:[#allocation6 + $0x2d0] sm:$0xff]
        %v370 = vld [vmem:[#allocation6 + $0x2d8] sm:$0xff]
        %v371 = vld [vmem:[#allocation6 + $0x2e0] sm:$0xff]
        %v372 = vld [vmem:[#allocation6 + $0x2e8] sm:$0xff]
        %v373 = vld [vmem:[#allocation6 + $0x2f0] sm:$0xff]
        %v374 = vld [vmem:[#allocation6 + $0x2f8] sm:$0xff]
        %v375 = vld [vmem:[#allocation6 + $0x300] sm:$0xff]
        %v376 = vld [vmem:[#allocation6 + $0x308] sm:$0xff]
        %v377 = vld [vmem:[#allocation6 + $0x310] sm:$0xff]
        %v378 = vld [vmem:[#allocation6 + $0x318] sm:$0xff]
        %v379 = vld [vmem:[#allocation6 + $0x320] sm:$0xff]
        %v380 = vld [vmem:[#allocation6 + $0x328] sm:$0xff]
        %v381 = vld [vmem:[#allocation6 + $0x330] sm:$0xff]
        %v382 = vld [vmem:[#allocation6 + $0x338] sm:$0xff]
        %v383 = vld [vmem:[#allocation6 + $0x340] sm:$0xff]
        %v384 = vld [vmem:[#allocation6 + $0x348] sm:$0xff]
        %v385 = vld [vmem:[#allocation6 + $0x350] sm:$0xff]
        %v386 = vld [vmem:[#allocation6 + $0x358] sm:$0xff]
        %v387 = vld [vmem:[#allocation6 + $0x360] sm:$0xff]
        %v388 = vld [vmem:[#allocation6 + $0x368] sm:$0xff]
        %v389 = vld [vmem:[#allocation6 + $0x370] sm:$0xff]
        %v390 = vld [vmem:[#allocation6 + $0x378] sm:$0xff]
        %v391 = vld [vmem:[#allocation6 + $0x380] sm:$0xff]
        %v392 = vld [vmem:[#allocation6 + $0x388] sm:$0xff]
        %v393 = vld [vmem:[#allocation6 + $0x390] sm:$0xff]
        %v394 = vld [vmem:[#allocation6 + $0x398] sm:$0xff]
        %v395 = vld [vmem:[#allocation6 + $0x3a0] sm:$0xff]
        %v396 = vld [vmem:[#allocation6 + $0x3a8] sm:$0xff]
        %v397 = vld [vmem:[#allocation6 + $0x3b0] sm:$0xff]
        %v398 = vld [vmem:[#allocation6 + $0x3b8] sm:$0xff]
        %v399 = vld [vmem:[#allocation6 + $0x3c0] sm:$0xff]
        %v400 = vld [vmem:[#allocation6 + $0x3c8] sm:$0xff]
        %v401 = vld [vmem:[#allocation6 + $0x3d0] sm:$0xff]
        %v402 = vld [vmem:[#allocation6 + $0x3d8] sm:$0xff]
        %v403 = vld [vmem:[#allocation6 + $0x3e0] sm:$0xff]
        %v404 = vld [vmem:[#allocation6 + $0x3e8] sm:$0xff]
        %v405 = vld [vmem:[#allocation6 + $0x3f0] sm:$0xff]
        %v406 = vld [vmem:[#allocation6 + $0x3f8] sm:$0xff]
        %s407 = scalar_lea.vmem [#allocation6], 1024
        %v408 = vld [vmem:[%s407] sm:$0xff]
        %v409 = vld [vmem:[%s407 + $0x8] sm:$0xff]
        %v410 = vld [vmem:[%s407 + $0x10] sm:$0xff]
        %v411 = vld [vmem:[%s407 + $0x18] sm:$0xff]
        %v412 = vld [vmem:[%s407 + $0x20] sm:$0xff]
        %v413 = vld [vmem:[%s407 + $0x28] sm:$0xff]
        %v414 = vld [vmem:[%s407 + $0x30] sm:$0xff]
        %v415 = vld [vmem:[%s407 + $0x38] sm:$0xff]
        %v416 = vld [vmem:[%s407 + $0x40] sm:$0xff]
        %v417 = vld [vmem:[%s407 + $0x48] sm:$0xff]
        %v418 = vld [vmem:[%s407 + $0x50] sm:$0xff]
        %v419 = vld [vmem:[%s407 + $0x58] sm:$0xff]
        %v420 = vld [vmem:[%s407 + $0x60] sm:$0xff]
        %v421 = vld [vmem:[%s407 + $0x68] sm:$0xff]
        %v422 = vld [vmem:[%s407 + $0x70] sm:$0xff]
        %v423 = vld [vmem:[%s407 + $0x78] sm:$0xff]
        %v424 = vld [vmem:[%s407 + $0x80] sm:$0xff]
        %v425 = vld [vmem:[%s407 + $0x88] sm:$0xff]
        %v426 = vld [vmem:[%s407 + $0x90] sm:$0xff]
        %v427 = vld [vmem:[%s407 + $0x98] sm:$0xff]
        %v428 = vld [vmem:[%s407 + $0xa0] sm:$0xff]
        %v429 = vld [vmem:[%s407 + $0xa8] sm:$0xff]
        %v430 = vld [vmem:[%s407 + $0xb0] sm:$0xff]
        %v431 = vld [vmem:[%s407 + $0xb8] sm:$0xff]
        %v432 = vld [vmem:[%s407 + $0xc0] sm:$0xff]
        %v433 = vld [vmem:[%s407 + $0xc8] sm:$0xff]
        %v434 = vld [vmem:[%s407 + $0xd0] sm:$0xff]
        %v435 = vld [vmem:[%s407 + $0xd8] sm:$0xff]
        %v436 = vld [vmem:[%s407 + $0xe0] sm:$0xff]
        %v437 = vld [vmem:[%s407 + $0xe8] sm:$0xff]
        %v438 = vld [vmem:[%s407 + $0xf0] sm:$0xff]
        %v439 = vld [vmem:[%s407 + $0xf8] sm:$0xff]
        %v440 = vld [vmem:[%s407 + $0x100] sm:$0xff]
        %v441 = vld [vmem:[%s407 + $0x108] sm:$0xff]
        %v442 = vld [vmem:[%s407 + $0x110] sm:$0xff]
        %v443 = vld [vmem:[%s407 + $0x118] sm:$0xff]
        %v444 = vld [vmem:[%s407 + $0x120] sm:$0xff]
        %v445 = vld [vmem:[%s407 + $0x128] sm:$0xff]
        %v446 = vld [vmem:[%s407 + $0x130] sm:$0xff]
        %v447 = vld [vmem:[%s407 + $0x138] sm:$0xff]
        %v448 = vld [vmem:[%s407 + $0x140] sm:$0xff]
        %v449 = vld [vmem:[%s407 + $0x148] sm:$0xff]
        %v450 = vld [vmem:[%s407 + $0x150] sm:$0xff]
        %v451 = vld [vmem:[%s407 + $0x158] sm:$0xff]
        %v452 = vld [vmem:[%s407 + $0x160] sm:$0xff]
        %v453 = vld [vmem:[%s407 + $0x168] sm:$0xff]
        %v454 = vld [vmem:[%s407 + $0x170] sm:$0xff]
        %v455 = vld [vmem:[%s407 + $0x178] sm:$0xff]
        %v456 = vld [vmem:[%s407 + $0x180] sm:$0xff]
        %v457 = vld [vmem:[%s407 + $0x188] sm:$0xff]
        %v458 = vld [vmem:[%s407 + $0x190] sm:$0xff]
        %v459 = vld [vmem:[%s407 + $0x198] sm:$0xff]
        %v460 = vld [vmem:[%s407 + $0x1a0] sm:$0xff]
        %v461 = vld [vmem:[%s407 + $0x1a8] sm:$0xff]
        %v462 = vld [vmem:[%s407 + $0x1b0] sm:$0xff]
        %v463 = vld [vmem:[%s407 + $0x1b8] sm:$0xff]
        %v464 = vld [vmem:[%s407 + $0x1c0] sm:$0xff]
        %v465 = vld [vmem:[%s407 + $0x1c8] sm:$0xff]
        %v466 = vld [vmem:[%s407 + $0x1d0] sm:$0xff]
        %v467 = vld [vmem:[%s407 + $0x1d8] sm:$0xff]
        %v468 = vld [vmem:[%s407 + $0x1e0] sm:$0xff]
        %v469 = vld [vmem:[%s407 + $0x1e8] sm:$0xff]
        %v470 = vld [vmem:[%s407 + $0x1f0] sm:$0xff]
        %v471 = vld [vmem:[%s407 + $0x1f8] sm:$0xff]
        %v472 = vld [vmem:[%s407 + $0x200] sm:$0xff]
        %v473 = vld [vmem:[%s407 + $0x208] sm:$0xff]
        %v474 = vld [vmem:[%s407 + $0x210] sm:$0xff]
        %v475 = vld [vmem:[%s407 + $0x218] sm:$0xff]
        %v476 = vld [vmem:[%s407 + $0x220] sm:$0xff]
        %v477 = vld [vmem:[%s407 + $0x228] sm:$0xff]
        %v478 = vld [vmem:[%s407 + $0x230] sm:$0xff]
        %v479 = vld [vmem:[%s407 + $0x238] sm:$0xff]
        %v480 = vld [vmem:[%s407 + $0x240] sm:$0xff]
        %v481 = vld [vmem:[%s407 + $0x248] sm:$0xff]
        %v482 = vld [vmem:[%s407 + $0x250] sm:$0xff]
        %v483 = vld [vmem:[%s407 + $0x258] sm:$0xff]
        %v484 = vld [vmem:[%s407 + $0x260] sm:$0xff]
        %v485 = vld [vmem:[%s407 + $0x268] sm:$0xff]
        %v486 = vld [vmem:[%s407 + $0x270] sm:$0xff]
        %v487 = vld [vmem:[%s407 + $0x278] sm:$0xff]
        %v488 = vld [vmem:[%s407 + $0x280] sm:$0xff]
        %v489 = vld [vmem:[%s407 + $0x288] sm:$0xff]
        %v490 = vld [vmem:[%s407 + $0x290] sm:$0xff]
        %v491 = vld [vmem:[%s407 + $0x298] sm:$0xff]
        %v492 = vld [vmem:[%s407 + $0x2a0] sm:$0xff]
        %v493 = vld [vmem:[%s407 + $0x2a8] sm:$0xff]
        %v494 = vld [vmem:[%s407 + $0x2b0] sm:$0xff]
        %v495 = vld [vmem:[%s407 + $0x2b8] sm:$0xff]
        %v496 = vld [vmem:[%s407 + $0x2c0] sm:$0xff]
        %v497 = vld [vmem:[%s407 + $0x2c8] sm:$0xff]
        %v498 = vld [vmem:[%s407 + $0x2d0] sm:$0xff]
        %v499 = vld [vmem:[%s407 + $0x2d8] sm:$0xff]
        %v500 = vld [vmem:[%s407 + $0x2e0] sm:$0xff]
        %v501 = vld [vmem:[%s407 + $0x2e8] sm:$0xff]
        %v502 = vld [vmem:[%s407 + $0x2f0] sm:$0xff]
        %v503 = vld [vmem:[%s407 + $0x2f8] sm:$0xff]
        %v504 = vld [vmem:[%s407 + $0x300] sm:$0xff]
        %v505 = vld [vmem:[%s407 + $0x308] sm:$0xff]
        %v506 = vld [vmem:[%s407 + $0x310] sm:$0xff]
        %v507 = vld [vmem:[%s407 + $0x318] sm:$0xff]
        %v508 = vld [vmem:[%s407 + $0x320] sm:$0xff]
        %v509 = vld [vmem:[%s407 + $0x328] sm:$0xff]
        %v510 = vld [vmem:[%s407 + $0x330] sm:$0xff]
        %v511 = vld [vmem:[%s407 + $0x338] sm:$0xff]
        %v512 = vld [vmem:[%s407 + $0x340] sm:$0xff]
        %v513 = vld [vmem:[%s407 + $0x348] sm:$0xff]
        %v514 = vld [vmem:[%s407 + $0x350] sm:$0xff]
        %v515 = vld [vmem:[%s407 + $0x358] sm:$0xff]
        %v516 = vld [vmem:[%s407 + $0x360] sm:$0xff]
        %v517 = vld [vmem:[%s407 + $0x368] sm:$0xff]
        %v518 = vld [vmem:[%s407 + $0x370] sm:$0xff]
        %v519 = vld [vmem:[%s407 + $0x378] sm:$0xff]
        %v520 = vld [vmem:[%s407 + $0x380] sm:$0xff]
        %v521 = vld [vmem:[%s407 + $0x388] sm:$0xff]
        %v522 = vld [vmem:[%s407 + $0x390] sm:$0xff]
        %v523 = vld [vmem:[%s407 + $0x398] sm:$0xff]
        %v524 = vld [vmem:[%s407 + $0x3a0] sm:$0xff]
        %v525 = vld [vmem:[%s407 + $0x3a8] sm:$0xff]
        %v526 = vld [vmem:[%s407 + $0x3b0] sm:$0xff]
        %v527 = vld [vmem:[%s407 + $0x3b8] sm:$0xff]
        %v528 = vld [vmem:[%s407 + $0x3c0] sm:$0xff]
        %v529 = vld [vmem:[%s407 + $0x3c8] sm:$0xff]
        %v530 = vld [vmem:[%s407 + $0x3d0] sm:$0xff]
        %v531 = vld [vmem:[%s407 + $0x3d8] sm:$0xff]
        %v532 = vld [vmem:[%s407 + $0x3e0] sm:$0xff]
        %v533 = vld [vmem:[%s407 + $0x3e8] sm:$0xff]
        %v534 = vld [vmem:[%s407 + $0x3f0] sm:$0xff]
        %v535 = vld [vmem:[%s407 + $0x3f8] sm:$0xff]
        %536 = vmatprep.subr.mxu0 %v409
        %537 = vmatpush1.msra.mxu0 %v408
        %538 = vmatprep.subr.mxu0 %v413
        %539 = vmatpush1.msra.mxu0 %v412
        %540 = vmatprep.subr.mxu0 %v417
        %541 = vmatpush1.msra.mxu0 %v416
        %542 = vmatprep.subr.mxu0 %v421
        %543 = vmatpush1.msra.mxu0 %v420
        %544 = vmatprep.subr.mxu0 %v425
        %545 = vmatpush1.msra.mxu0 %v424
        %546 = vmatprep.subr.mxu0 %v429
        %547 = vmatpush1.msra.mxu0 %v428
        %548 = vmatprep.subr.mxu0 %v433
        %549 = vmatpush1.msra.mxu0 %v432
        %550 = vmatprep.subr.mxu0 %v437
        %551 = vmatpush1.msra.mxu0 %v436
        %552 = vmatprep.subr.mxu0 %v441
        %553 = vmatpush1.msra.mxu0 %v440
        %554 = vmatprep.subr.mxu0 %v445
        %555 = vmatpush1.msra.mxu0 %v444
        %556 = vmatprep.subr.mxu0 %v449
        %557 = vmatpush1.msra.mxu0 %v448
        %558 = vmatprep.subr.mxu0 %v453
        %559 = vmatpush1.msra.mxu0 %v452
        %560 = vmatprep.subr.mxu0 %v457
        %561 = vmatpush1.msra.mxu0 %v456
        %562 = vmatprep.subr.mxu0 %v461
        %563 = vmatpush1.msra.mxu0 %v460
        %564 = vmatprep.subr.mxu0 %v465
        %565 = vmatpush1.msra.mxu0 %v464
        %566 = vmatprep.subr.mxu0 %v469
        %567 = vmatpush1.msra.mxu0 %v468
        %568 = vmatprep.subr.mxu0 %v473
        %569 = vmatpush1.msra.mxu0 %v472
        %570 = vmatprep.subr.mxu0 %v477
        %571 = vmatpush1.msra.mxu0 %v476
        %572 = vmatprep.subr.mxu0 %v481
        %573 = vmatpush1.msra.mxu0 %v480
        %574 = vmatprep.subr.mxu0 %v485
        %575 = vmatpush1.msra.mxu0 %v484
        %576 = vmatprep.subr.mxu0 %v489
        %577 = vmatpush1.msra.mxu0 %v488
        %578 = vmatprep.subr.mxu0 %v493
        %579 = vmatpush1.msra.mxu0 %v492
        %580 = vmatprep.subr.mxu0 %v497
        %581 = vmatpush1.msra.mxu0 %v496
        %582 = vmatprep.subr.mxu0 %v501
        %583 = vmatpush1.msra.mxu0 %v500
        %584 = vmatprep.subr.mxu0 %v505
        %585 = vmatpush1.msra.mxu0 %v504
        %586 = vmatprep.subr.mxu0 %v509
        %587 = vmatpush1.msra.mxu0 %v508
        %588 = vmatprep.subr.mxu0 %v513
        %589 = vmatpush1.msra.mxu0 %v512
        %590 = vmatprep.subr.mxu0 %v517
        %591 = vmatpush1.msra.mxu0 %v516
        %592 = vmatprep.subr.mxu0 %v521
        %593 = vmatpush1.msra.mxu0 %v520
        %594 = vmatprep.subr.mxu0 %v525
        %595 = vmatpush1.msra.mxu0 %v524
        %596 = vmatprep.subr.mxu0 %v529
        %597 = vmatpush1.msra.mxu0 %v528
        %598 = vmatprep.subr.mxu0 %v533
        %599 = vmatpush1.msra.mxu0 %v532
        %600 = vmatprep.mubr.f32.mxu0 %v278
        %601 = vmatmul.mubr.f32.gmra.mrb[0].mxu0 %v277
        %v602 = vpop.f32.mrb[0].mxu0
        %v603 = vadd.f32 0.0, %v602
        %v604 = vpop.f32.mrb[0].mxu0
        %v605 = vadd.f32 0.0, %v604
        %606 = vdwg.mxu0
        %607 = vmatprep.subr.mxu0 %v411
        %608 = vmatpush1.msra.mxu0 %v410
        %609 = vmatprep.subr.mxu0 %v415
        %610 = vmatpush1.msra.mxu0 %v414
        %611 = vmatprep.subr.mxu0 %v419
        %612 = vmatpush1.msra.mxu0 %v418
        %613 = vmatprep.subr.mxu0 %v423
        %614 = vmatpush1.msra.mxu0 %v422
        %615 = vmatprep.subr.mxu0 %v427
        %616 = vmatpush1.msra.mxu0 %v426
        %617 = vmatprep.subr.mxu0 %v431
        %618 = vmatpush1.msra.mxu0 %v430
        %619 = vmatprep.subr.mxu0 %v435
        %620 = vmatpush1.msra.mxu0 %v434
        %621 = vmatprep.subr.mxu0 %v439
        %622 = vmatpush1.msra.mxu0 %v438
        %623 = vmatprep.subr.mxu0 %v443
        %624 = vmatpush1.msra.mxu0 %v442
        %625 = vmatprep.subr.mxu0 %v447
        %626 = vmatpush1.msra.mxu0 %v446
        %627 = vmatprep.subr.mxu0 %v451
        %628 = vmatpush1.msra.mxu0 %v450
        %629 = vmatprep.subr.mxu0 %v455
        %630 = vmatpush1.msra.mxu0 %v454
        %631 = vmatprep.subr.mxu0 %v459
        %632 = vmatpush1.msra.mxu0 %v458
        %633 = vmatprep.subr.mxu0 %v463
        %634 = vmatpush1.msra.mxu0 %v462
        %635 = vmatprep.subr.mxu0 %v467
        %636 = vmatpush1.msra.mxu0 %v466
        %637 = vmatprep.subr.mxu0 %v471
        %638 = vmatpush1.msra.mxu0 %v470
        %639 = vmatprep.subr.mxu0 %v475
        %640 = vmatpush1.msra.mxu0 %v474
        %641 = vmatprep.subr.mxu0 %v479
        %642 = vmatpush1.msra.mxu0 %v478
        %643 = vmatprep.subr.mxu0 %v483
        %644 = vmatpush1.msra.mxu0 %v482
        %645 = vmatprep.subr.mxu0 %v487
        %646 = vmatpush1.msra.mxu0 %v486
        %647 = vmatprep.subr.mxu0 %v491
        %648 = vmatpush1.msra.mxu0 %v490
        %649 = vmatprep.subr.mxu0 %v495
        %650 = vmatpush1.msra.mxu0 %v494
        %651 = vmatprep.subr.mxu0 %v499
        %652 = vmatpush1.msra.mxu0 %v498
        %653 = vmatprep.subr.mxu0 %v503
        %654 = vmatpush1.msra.mxu0 %v502
        %655 = vmatprep.subr.mxu0 %v507
        %656 = vmatpush1.msra.mxu0 %v506
        %657 = vmatprep.subr.mxu0 %v511
        %658 = vmatpush1.msra.mxu0 %v510
        %659 = vmatprep.subr.mxu0 %v515
        %660 = vmatpush1.msra.mxu0 %v514
        %661 = vmatprep.subr.mxu0 %v519
        %662 = vmatpush1.msra.mxu0 %v518
        %663 = vmatprep.subr.mxu0 %v523
        %664 = vmatpush1.msra.mxu0 %v522
        %665 = vmatprep.subr.mxu0 %v527
        %666 = vmatpush1.msra.mxu0 %v526
        %667 = vmatprep.subr.mxu0 %v531
        %668 = vmatpush1.msra.mxu0 %v530
        %669 = vmatprep.subr.mxu0 %v535
        %670 = vmatpush1.msra.mxu0 %v534
        %671 = vmatprep.mubr.f32.mxu0 %v278
        %672 = vmatmul.mubr.f32.gmra.mrb[0].mxu0 %v277
        %v673 = vpop.f32.mrb[0].mxu0
        %v674 = vadd.f32 0.0, %v673
        %v675 = vpop.f32.mrb[0].mxu0
        %v676 = vadd.f32 0.0, %v675
        %677 = vdwg.mxu0
        %678 = vmatprep.subr.mxu0 %v280
        %679 = vmatpush1.msra.mxu0 %v279
        %680 = vmatprep.subr.mxu0 %v284
        %681 = vmatpush1.msra.mxu0 %v283
        %682 = vmatprep.subr.mxu0 %v288
        %683 = vmatpush1.msra.mxu0 %v287
        %684 = vmatprep.subr.mxu0 %v292
        %685 = vmatpush1.msra.mxu0 %v291
        %686 = vmatprep.subr.mxu0 %v296
        %687 = vmatpush1.msra.mxu0 %v295
        %688 = vmatprep.subr.mxu0 %v300
        %689 = vmatpush1.msra.mxu0 %v299
        %690 = vmatprep.subr.mxu0 %v304
        %691 = vmatpush1.msra.mxu0 %v303
        %692 = vmatprep.subr.mxu0 %v308
        %693 = vmatpush1.msra.mxu0 %v307
        %694 = vmatprep.subr.mxu0 %v312
        %695 = vmatpush1.msra.mxu0 %v311
        %696 = vmatprep.subr.mxu0 %v316
        %697 = vmatpush1.msra.mxu0 %v315
        %698 = vmatprep.subr.mxu0 %v320
        %699 = vmatpush1.msra.mxu0 %v319
        %700 = vmatprep.subr.mxu0 %v324
        %701 = vmatpush1.msra.mxu0 %v323
        %702 = vmatprep.subr.mxu0 %v328
        %703 = vmatpush1.msra.mxu0 %v327
        %704 = vmatprep.subr.mxu0 %v332
        %705 = vmatpush1.msra.mxu0 %v331
        %706 = vmatprep.subr.mxu0 %v336
        %707 = vmatpush1.msra.mxu0 %v335
        %708 = vmatprep.subr.mxu0 %v340
        %709 = vmatpush1.msra.mxu0 %v339
        %710 = vmatprep.subr.mxu0 %v344
        %711 = vmatpush1.msra.mxu0 %v343
        %712 = vmatprep.subr.mxu0 %v348
        %713 = vmatpush1.msra.mxu0 %v347
        %714 = vmatprep.subr.mxu0 %v352
        %715 = vmatpush1.msra.mxu0 %v351
        %716 = vmatprep.subr.mxu0 %v356
        %717 = vmatpush1.msra.mxu0 %v355
        %718 = vmatprep.subr.mxu0 %v360
        %719 = vmatpush1.msra.mxu0 %v359
        %720 = vmatprep.subr.mxu0 %v364
        %721 = vmatpush1.msra.mxu0 %v363
        %722 = vmatprep.subr.mxu0 %v368
        %723 = vmatpush1.msra.mxu0 %v367
        %724 = vmatprep.subr.mxu0 %v372
        %725 = vmatpush1.msra.mxu0 %v371
        %726 = vmatprep.subr.mxu0 %v376
        %727 = vmatpush1.msra.mxu0 %v375
        %728 = vmatprep.subr.mxu0 %v380
        %729 = vmatpush1.msra.mxu0 %v379
        %730 = vmatprep.subr.mxu0 %v384
        %731 = vmatpush1.msra.mxu0 %v383
        %732 = vmatprep.subr.mxu0 %v388
        %733 = vmatpush1.msra.mxu0 %v387
        %734 = vmatprep.subr.mxu0 %v392
        %735 = vmatpush1.msra.mxu0 %v391
        %736 = vmatprep.subr.mxu0 %v396
        %737 = vmatpush1.msra.mxu0 %v395
        %738 = vmatprep.subr.mxu0 %v400
        %739 = vmatpush1.msra.mxu0 %v399
        %740 = vmatprep.subr.mxu0 %v404
        %741 = vmatpush1.msra.mxu0 %v403
        %742 = vmatprep.mubr.f32.mxu0 %v274
        %743 = vmatmul.mubr.f32.gmra.mrb[0].mxu0 %v273
        %v744 = vpop.f32.mrb[0].mxu0
        %v745 = vadd.f32 %v603, %v744
        %v746 = vpop.f32.mrb[0].mxu0
        %v747 = vadd.f32 %v605, %v746
        %748 = vdwg.mxu0
        %749 = vmatprep.subr.mxu0 %v282
        %750 = vmatpush1.msra.mxu0 %v281
        %751 = vmatprep.subr.mxu0 %v286
        %752 = vmatpush1.msra.mxu0 %v285
        %753 = vmatprep.subr.mxu0 %v290
        %754 = vmatpush1.msra.mxu0 %v289
        %755 = vmatprep.subr.mxu0 %v294
        %756 = vmatpush1.msra.mxu0 %v293
        %757 = vmatprep.subr.mxu0 %v298
        %758 = vmatpush1.msra.mxu0 %v297
        %759 = vmatprep.subr.mxu0 %v302
        %760 = vmatpush1.msra.mxu0 %v301
        %761 = vmatprep.subr.mxu0 %v306
        %762 = vmatpush1.msra.mxu0 %v305
        %763 = vmatprep.subr.mxu0 %v310
        %764 = vmatpush1.msra.mxu0 %v309
        %765 = vmatprep.subr.mxu0 %v314
        %766 = vmatpush1.msra.mxu0 %v313
        %767 = vmatprep.subr.mxu0 %v318
        %768 = vmatpush1.msra.mxu0 %v317
        %769 = vmatprep.subr.mxu0 %v322
        %770 = vmatpush1.msra.mxu0 %v321
        %771 = vmatprep.subr.mxu0 %v326
        %772 = vmatpush1.msra.mxu0 %v325
        %773 = vmatprep.subr.mxu0 %v330
        %774 = vmatpush1.msra.mxu0 %v329
        %775 = vmatprep.subr.mxu0 %v334
        %776 = vmatpush1.msra.mxu0 %v333
        %777 = vmatprep.subr.mxu0 %v338
        %778 = vmatpush1.msra.mxu0 %v337
        %779 = vmatprep.subr.mxu0 %v342
        %780 = vmatpush1.msra.mxu0 %v341
        %781 = vmatprep.subr.mxu0 %v346
        %782 = vmatpush1.msra.mxu0 %v345
        %783 = vmatprep.subr.mxu0 %v350
        %784 = vmatpush1.msra.mxu0 %v349
        %785 = vmatprep.subr.mxu0 %v354
        %786 = vmatpush1.msra.mxu0 %v353
        %787 = vmatprep.subr.mxu0 %v358
        %788 = vmatpush1.msra.mxu0 %v357
        %789 = vmatprep.subr.mxu0 %v362
        %790 = vmatpush1.msra.mxu0 %v361
        %791 = vmatprep.subr.mxu0 %v366
        %792 = vmatpush1.msra.mxu0 %v365
        %793 = vmatprep.subr.mxu0 %v370
        %794 = vmatpush1.msra.mxu0 %v369
        %795 = vmatprep.subr.mxu0 %v374
        %796 = vmatpush1.msra.mxu0 %v373
        %797 = vmatprep.subr.mxu0 %v378
        %798 = vmatpush1.msra.mxu0 %v377
        %799 = vmatprep.subr.mxu0 %v382
        %800 = vmatpush1.msra.mxu0 %v381
        %801 = vmatprep.subr.mxu0 %v386
        %802 = vmatpush1.msra.mxu0 %v385
        %803 = vmatprep.subr.mxu0 %v390
        %804 = vmatpush1.msra.mxu0 %v389
        %805 = vmatprep.subr.mxu0 %v394
        %806 = vmatpush1.msra.mxu0 %v393
        %807 = vmatprep.subr.mxu0 %v398
        %808 = vmatpush1.msra.mxu0 %v397
        %809 = vmatprep.subr.mxu0 %v402
        %810 = vmatpush1.msra.mxu0 %v401
        %811 = vmatprep.subr.mxu0 %v406
        %812 = vmatpush1.msra.mxu0 %v405
        %813 = vmatprep.mubr.f32.mxu0 %v274
        %814 = vmatmul.mubr.f32.gmra.mrb[0].mxu0 %v273
        %v815 = vpop.f32.mrb[0].mxu0
        %v816 = vadd.f32 %v674, %v815
        %v817 = vpop.f32.mrb[0].mxu0
        %v818 = vadd.f32 %v676, %v817
        %819 = vdwg.mxu0
        %s820 = sld [smem:[#allocation9]]
        %v821 = vstv %s820
        %v822 = vadd.f32 %v745, %v821
        %v823 = vadd.f32 %v747, %v821
        %s824 = sld [smem:[#allocation9 + $0x1]]
        %v825 = vstv %s824
        %v826 = vadd.f32 %v816, %v825
        %v827 = vadd.f32 %v818, %v825
        %v828 = vld [vmem:[#allocation8] sm:$0xff]
        %v829 = vld [vmem:[#allocation8 + $0x8] sm:$0xff]
        %v830 = vld [vmem:[#allocation8 + $0x10] sm:$0xff]
        %v831 = vld [vmem:[#allocation8 + $0x18] sm:$0xff]
        %v832 = vld [vmem:[#allocation8 + $0x20] sm:$0xff]
        %v833 = vld [vmem:[#allocation8 + $0x28] sm:$0xff]
        %v834 = vld [vmem:[#allocation8 + $0x30] sm:$0xff]
        %v835 = vld [vmem:[#allocation8 + $0x38] sm:$0xff]
        %v836 = vld [vmem:[#allocation8 + $0x40] sm:$0xff]
        %v837 = vld [vmem:[#allocation8 + $0x48] sm:$0xff]
        %v838 = vld [vmem:[#allocation8 + $0x50] sm:$0xff]
        %v839 = vld [vmem:[#allocation8 + $0x58] sm:$0xff]
        %v840 = vld [vmem:[#allocation8 + $0x60] sm:$0xff]
        %v841 = vld [vmem:[#allocation8 + $0x68] sm:$0xff]
        %v842 = vld [vmem:[#allocation8 + $0x70] sm:$0xff]
        %v843 = vld [vmem:[#allocation8 + $0x78] sm:$0xff]
        %v844 = vld [vmem:[#allocation8 + $0x80] sm:$0xff]
        %v845 = vld [vmem:[#allocation8 + $0x88] sm:$0xff]
        %v846 = vld [vmem:[#allocation8 + $0x90] sm:$0xff]
        %v847 = vld [vmem:[#allocation8 + $0x98] sm:$0xff]
        %v848 = vld [vmem:[#allocation8 + $0xa0] sm:$0xff]
        %v849 = vld [vmem:[#allocation8 + $0xa8] sm:$0xff]
        %v850 = vld [vmem:[#allocation8 + $0xb0] sm:$0xff]
        %v851 = vld [vmem:[#allocation8 + $0xb8] sm:$0xff]
        %v852 = vld [vmem:[#allocation8 + $0xc0] sm:$0xff]
        %v853 = vld [vmem:[#allocation8 + $0xc8] sm:$0xff]
        %v854 = vld [vmem:[#allocation8 + $0xd0] sm:$0xff]
        %v855 = vld [vmem:[#allocation8 + $0xd8] sm:$0xff]
        %v856 = vld [vmem:[#allocation8 + $0xe0] sm:$0xff]
        %v857 = vld [vmem:[#allocation8 + $0xe8] sm:$0xff]
        %v858 = vld [vmem:[#allocation8 + $0xf0] sm:$0xff]
        %v859 = vld [vmem:[#allocation8 + $0xf8] sm:$0xff]
        %v860 = vld [vmem:[#allocation8 + $0x100] sm:$0xff]
        %v861 = vld [vmem:[#allocation8 + $0x108] sm:$0xff]
        %v862 = vld [vmem:[#allocation8 + $0x110] sm:$0xff]
        %v863 = vld [vmem:[#allocation8 + $0x118] sm:$0xff]
        %v864 = vld [vmem:[#allocation8 + $0x120] sm:$0xff]
        %v865 = vld [vmem:[#allocation8 + $0x128] sm:$0xff]
        %v866 = vld [vmem:[#allocation8 + $0x130] sm:$0xff]
        %v867 = vld [vmem:[#allocation8 + $0x138] sm:$0xff]
        %v868 = vld [vmem:[#allocation8 + $0x140] sm:$0xff]
        %v869 = vld [vmem:[#allocation8 + $0x148] sm:$0xff]
        %v870 = vld [vmem:[#allocation8 + $0x150] sm:$0xff]
        %v871 = vld [vmem:[#allocation8 + $0x158] sm:$0xff]
        %v872 = vld [vmem:[#allocation8 + $0x160] sm:$0xff]
        %v873 = vld [vmem:[#allocation8 + $0x168] sm:$0xff]
        %v874 = vld [vmem:[#allocation8 + $0x170] sm:$0xff]
        %v875 = vld [vmem:[#allocation8 + $0x178] sm:$0xff]
        %v876 = vld [vmem:[#allocation8 + $0x180] sm:$0xff]
        %v877 = vld [vmem:[#allocation8 + $0x188] sm:$0xff]
        %v878 = vld [vmem:[#allocation8 + $0x190] sm:$0xff]
        %v879 = vld [vmem:[#allocation8 + $0x198] sm:$0xff]
        %v880 = vld [vmem:[#allocation8 + $0x1a0] sm:$0xff]
        %v881 = vld [vmem:[#allocation8 + $0x1a8] sm:$0xff]
        %v882 = vld [vmem:[#allocation8 + $0x1b0] sm:$0xff]
        %v883 = vld [vmem:[#allocation8 + $0x1b8] sm:$0xff]
        %v884 = vld [vmem:[#allocation8 + $0x1c0] sm:$0xff]
        %v885 = vld [vmem:[#allocation8 + $0x1c8] sm:$0xff]
        %v886 = vld [vmem:[#allocation8 + $0x1d0] sm:$0xff]
        %v887 = vld [vmem:[#allocation8 + $0x1d8] sm:$0xff]
        %v888 = vld [vmem:[#allocation8 + $0x1e0] sm:$0xff]
        %v889 = vld [vmem:[#allocation8 + $0x1e8] sm:$0xff]
        %v890 = vld [vmem:[#allocation8 + $0x1f0] sm:$0xff]
        %v891 = vld [vmem:[#allocation8 + $0x1f8] sm:$0xff]
        %s892 = scalar_lea.vmem [#allocation8], 512
        %v893 = vld [vmem:[%s892] sm:$0xff]
        %v894 = vld [vmem:[%s892 + $0x8] sm:$0xff]
        %v895 = vld [vmem:[%s892 + $0x10] sm:$0xff]
        %v896 = vld [vmem:[%s892 + $0x18] sm:$0xff]
        %v897 = vld [vmem:[%s892 + $0x20] sm:$0xff]
        %v898 = vld [vmem:[%s892 + $0x28] sm:$0xff]
        %v899 = vld [vmem:[%s892 + $0x30] sm:$0xff]
        %v900 = vld [vmem:[%s892 + $0x38] sm:$0xff]
        %v901 = vld [vmem:[%s892 + $0x40] sm:$0xff]
        %v902 = vld [vmem:[%s892 + $0x48] sm:$0xff]
        %v903 = vld [vmem:[%s892 + $0x50] sm:$0xff]
        %v904 = vld [vmem:[%s892 + $0x58] sm:$0xff]
        %v905 = vld [vmem:[%s892 + $0x60] sm:$0xff]
        %v906 = vld [vmem:[%s892 + $0x68] sm:$0xff]
        %v907 = vld [vmem:[%s892 + $0x70] sm:$0xff]
        %v908 = vld [vmem:[%s892 + $0x78] sm:$0xff]
        %v909 = vld [vmem:[%s892 + $0x80] sm:$0xff]
        %v910 = vld [vmem:[%s892 + $0x88] sm:$0xff]
        %v911 = vld [vmem:[%s892 + $0x90] sm:$0xff]
        %v912 = vld [vmem:[%s892 + $0x98] sm:$0xff]
        %v913 = vld [vmem:[%s892 + $0xa0] sm:$0xff]
        %v914 = vld [vmem:[%s892 + $0xa8] sm:$0xff]
        %v915 = vld [vmem:[%s892 + $0xb0] sm:$0xff]
        %v916 = vld [vmem:[%s892 + $0xb8] sm:$0xff]
        %v917 = vld [vmem:[%s892 + $0xc0] sm:$0xff]
        %v918 = vld [vmem:[%s892 + $0xc8] sm:$0xff]
        %v919 = vld [vmem:[%s892 + $0xd0] sm:$0xff]
        %v920 = vld [vmem:[%s892 + $0xd8] sm:$0xff]
        %v921 = vld [vmem:[%s892 + $0xe0] sm:$0xff]
        %v922 = vld [vmem:[%s892 + $0xe8] sm:$0xff]
        %v923 = vld [vmem:[%s892 + $0xf0] sm:$0xff]
        %v924 = vld [vmem:[%s892 + $0xf8] sm:$0xff]
        %v925 = vld [vmem:[%s892 + $0x100] sm:$0xff]
        %v926 = vld [vmem:[%s892 + $0x108] sm:$0xff]
        %v927 = vld [vmem:[%s892 + $0x110] sm:$0xff]
        %v928 = vld [vmem:[%s892 + $0x118] sm:$0xff]
        %v929 = vld [vmem:[%s892 + $0x120] sm:$0xff]
        %v930 = vld [vmem:[%s892 + $0x128] sm:$0xff]
        %v931 = vld [vmem:[%s892 + $0x130] sm:$0xff]
        %v932 = vld [vmem:[%s892 + $0x138] sm:$0xff]
        %v933 = vld [vmem:[%s892 + $0x140] sm:$0xff]
        %v934 = vld [vmem:[%s892 + $0x148] sm:$0xff]
        %v935 = vld [vmem:[%s892 + $0x150] sm:$0xff]
        %v936 = vld [vmem:[%s892 + $0x158] sm:$0xff]
        %v937 = vld [vmem:[%s892 + $0x160] sm:$0xff]
        %v938 = vld [vmem:[%s892 + $0x168] sm:$0xff]
        %v939 = vld [vmem:[%s892 + $0x170] sm:$0xff]
        %v940 = vld [vmem:[%s892 + $0x178] sm:$0xff]
        %v941 = vld [vmem:[%s892 + $0x180] sm:$0xff]
        %v942 = vld [vmem:[%s892 + $0x188] sm:$0xff]
        %v943 = vld [vmem:[%s892 + $0x190] sm:$0xff]
        %v944 = vld [vmem:[%s892 + $0x198] sm:$0xff]
        %v945 = vld [vmem:[%s892 + $0x1a0] sm:$0xff]
        %v946 = vld [vmem:[%s892 + $0x1a8] sm:$0xff]
        %v947 = vld [vmem:[%s892 + $0x1b0] sm:$0xff]
        %v948 = vld [vmem:[%s892 + $0x1b8] sm:$0xff]
        %v949 = vld [vmem:[%s892 + $0x1c0] sm:$0xff]
        %v950 = vld [vmem:[%s892 + $0x1c8] sm:$0xff]
        %v951 = vld [vmem:[%s892 + $0x1d0] sm:$0xff]
        %v952 = vld [vmem:[%s892 + $0x1d8] sm:$0xff]
        %v953 = vld [vmem:[%s892 + $0x1e0] sm:$0xff]
        %v954 = vld [vmem:[%s892 + $0x1e8] sm:$0xff]
        %v955 = vld [vmem:[%s892 + $0x1f0] sm:$0xff]
        %v956 = vld [vmem:[%s892 + $0x1f8] sm:$0xff]
        %957 = vmatprep.subr.mxu0 %v894
        %958 = vmatpush1.msra.mxu0 %v893
        %959 = vmatprep.subr.mxu0 %v896
        %960 = vmatpush1.msra.mxu0 %v895
        %961 = vmatprep.subr.mxu0 %v898
        %962 = vmatpush1.msra.mxu0 %v897
        %963 = vmatprep.subr.mxu0 %v900
        %964 = vmatpush1.msra.mxu0 %v899
        %965 = vmatprep.subr.mxu0 %v902
        %966 = vmatpush1.msra.mxu0 %v901
        %967 = vmatprep.subr.mxu0 %v904
        %968 = vmatpush1.msra.mxu0 %v903
        %969 = vmatprep.subr.mxu0 %v906
        %970 = vmatpush1.msra.mxu0 %v905
        %971 = vmatprep.subr.mxu0 %v908
        %972 = vmatpush1.msra.mxu0 %v907
        %973 = vmatprep.subr.mxu0 %v910
        %974 = vmatpush1.msra.mxu0 %v909
        %975 = vmatprep.subr.mxu0 %v912
        %976 = vmatpush1.msra.mxu0 %v911
        %977 = vmatprep.subr.mxu0 %v914
        %978 = vmatpush1.msra.mxu0 %v913
        %979 = vmatprep.subr.mxu0 %v916
        %980 = vmatpush1.msra.mxu0 %v915
        %981 = vmatprep.subr.mxu0 %v918
        %982 = vmatpush1.msra.mxu0 %v917
        %983 = vmatprep.subr.mxu0 %v920
        %984 = vmatpush1.msra.mxu0 %v919
        %985 = vmatprep.subr.mxu0 %v922
        %986 = vmatpush1.msra.mxu0 %v921
        %987 = vmatprep.subr.mxu0 %v924
        %988 = vmatpush1.msra.mxu0 %v923
        %989 = vmatprep.subr.mxu0 %v926
        %990 = vmatpush1.msra.mxu0 %v925
        %991 = vmatprep.subr.mxu0 %v928
        %992 = vmatpush1.msra.mxu0 %v927
        %993 = vmatprep.subr.mxu0 %v930
        %994 = vmatpush1.msra.mxu0 %v929
        %995 = vmatprep.subr.mxu0 %v932
        %996 = vmatpush1.msra.mxu0 %v931
        %997 = vmatprep.subr.mxu0 %v934
        %998 = vmatpush1.msra.mxu0 %v933
        %999 = vmatprep.subr.mxu0 %v936
        %1000 = vmatpush1.msra.mxu0 %v935
        %1001 = vmatprep.subr.mxu0 %v938
        %1002 = vmatpush1.msra.mxu0 %v937
        %1003 = vmatprep.subr.mxu0 %v940
        %1004 = vmatpush1.msra.mxu0 %v939
        %1005 = vmatprep.subr.mxu0 %v942
        %1006 = vmatpush1.msra.mxu0 %v941
        %1007 = vmatprep.subr.mxu0 %v944
        %1008 = vmatpush1.msra.mxu0 %v943
        %1009 = vmatprep.subr.mxu0 %v946
        %1010 = vmatpush1.msra.mxu0 %v945
        %1011 = vmatprep.subr.mxu0 %v948
        %1012 = vmatpush1.msra.mxu0 %v947
        %1013 = vmatprep.subr.mxu0 %v950
        %1014 = vmatpush1.msra.mxu0 %v949
        %1015 = vmatprep.subr.mxu0 %v952
        %1016 = vmatpush1.msra.mxu0 %v951
        %1017 = vmatprep.subr.mxu0 %v954
        %1018 = vmatpush1.msra.mxu0 %v953
        %1019 = vmatprep.subr.mxu0 %v956
        %1020 = vmatpush1.msra.mxu0 %v955
        %1021 = vmatprep.mubr.f32.mxu0 %v827
        %1022 = vmatmul.mubr.f32.gmra.mrb[0].mxu0 %v826
        %v1023 = vpop.f32.mrb[0].mxu0
        %v1024 = vadd.f32 0.0, %v1023
        %v1025 = vpop.f32.mrb[0].mxu0
        %v1026 = vadd.f32 0.0, %v1025
        %1027 = vdwg.mxu0
        %1028 = vmatprep.subr.mxu0 %v829
        %1029 = vmatpush1.msra.mxu0 %v828
        %1030 = vmatprep.subr.mxu0 %v831
        %1031 = vmatpush1.msra.mxu0 %v830
        %1032 = vmatprep.subr.mxu0 %v833
        %1033 = vmatpush1.msra.mxu0 %v832
        %1034 = vmatprep.subr.mxu0 %v835
        %1035 = vmatpush1.msra.mxu0 %v834
        %1036 = vmatprep.subr.mxu0 %v837
        %1037 = vmatpush1.msra.mxu0 %v836
        %1038 = vmatprep.subr.mxu0 %v839
        %1039 = vmatpush1.msra.mxu0 %v838
        %1040 = vmatprep.subr.mxu0 %v841
        %1041 = vmatpush1.msra.mxu0 %v840
        %1042 = vmatprep.subr.mxu0 %v843
        %1043 = vmatpush1.msra.mxu0 %v842
        %1044 = vmatprep.subr.mxu0 %v845
        %1045 = vmatpush1.msra.mxu0 %v844
        %1046 = vmatprep.subr.mxu0 %v847
        %1047 = vmatpush1.msra.mxu0 %v846
        %1048 = vmatprep.subr.mxu0 %v849
        %1049 = vmatpush1.msra.mxu0 %v848
        %1050 = vmatprep.subr.mxu0 %v851
        %1051 = vmatpush1.msra.mxu0 %v850
        %1052 = vmatprep.subr.mxu0 %v853
        %1053 = vmatpush1.msra.mxu0 %v852
        %1054 = vmatprep.subr.mxu0 %v855
        %1055 = vmatpush1.msra.mxu0 %v854
        %1056 = vmatprep.subr.mxu0 %v857
        %1057 = vmatpush1.msra.mxu0 %v856
        %1058 = vmatprep.subr.mxu0 %v859
        %1059 = vmatpush1.msra.mxu0 %v858
        %1060 = vmatprep.subr.mxu0 %v861
        %1061 = vmatpush1.msra.mxu0 %v860
        %1062 = vmatprep.subr.mxu0 %v863
        %1063 = vmatpush1.msra.mxu0 %v862
        %1064 = vmatprep.subr.mxu0 %v865
        %1065 = vmatpush1.msra.mxu0 %v864
        %1066 = vmatprep.subr.mxu0 %v867
        %1067 = vmatpush1.msra.mxu0 %v866
        %1068 = vmatprep.subr.mxu0 %v869
        %1069 = vmatpush1.msra.mxu0 %v868
        %1070 = vmatprep.subr.mxu0 %v871
        %1071 = vmatpush1.msra.mxu0 %v870
        %1072 = vmatprep.subr.mxu0 %v873
        %1073 = vmatpush1.msra.mxu0 %v872
        %1074 = vmatprep.subr.mxu0 %v875
        %1075 = vmatpush1.msra.mxu0 %v874
        %1076 = vmatprep.subr.mxu0 %v877
        %1077 = vmatpush1.msra.mxu0 %v876
        %1078 = vmatprep.subr.mxu0 %v879
        %1079 = vmatpush1.msra.mxu0 %v878
        %1080 = vmatprep.subr.mxu0 %v881
        %1081 = vmatpush1.msra.mxu0 %v880
        %1082 = vmatprep.subr.mxu0 %v883
        %1083 = vmatpush1.msra.mxu0 %v882
        %1084 = vmatprep.subr.mxu0 %v885
        %1085 = vmatpush1.msra.mxu0 %v884
        %1086 = vmatprep.subr.mxu0 %v887
        %1087 = vmatpush1.msra.mxu0 %v886
        %1088 = vmatprep.subr.mxu0 %v889
        %1089 = vmatpush1.msra.mxu0 %v888
        %1090 = vmatprep.subr.mxu0 %v891
        %1091 = vmatpush1.msra.mxu0 %v890
        %1092 = vmatprep.mubr.f32.mxu0 %v823
        %1093 = vmatmul.mubr.f32.gmra.mrb[0].mxu0 %v822
        %v1094 = vpop.f32.mrb[0].mxu0
        %v1095 = vadd.f32 %v1024, %v1094
        %v1096 = vpop.f32.mrb[0].mxu0
        %v1097 = vadd.f32 %v1026, %v1096
        %1098 = vdwg.mxu0
        %s1099 = sld [smem:[#allocation9 + $0x2]]
        %v1100 = vstv %s1099
        %v1101 = vadd.f32 %v1095, %v1100
        %v1102 = vadd.f32 %v1097, %v1100
        %v1103 = vxor.u32 %v1101, 2147483648
        %v1104 = vxor.u32 %v1102, 2147483648
        %v1105 = vmul.f32 %v1103, 1.442695
        %v1106 = vpow.pop %v1105
        %v1107 = vmul.f32 %v1104, 1.442695
        %v1108 = vpow.pop %v1107
        %v1109 = vadd.f32 %v1106, 1.0
        %v1110 = vadd.f32 %v1108, 1.0
        %v1111 = vrcp.pop %v1109
        %v1112 = vmul.f32 1.0, %v1111
        %v1113 = vrcp.pop %v1110
        %v1114 = vmul.f32 1.0, %v1113
        %1115 = vst [vmem:[%s256] sm:$0xff] %v1112
        %1116 = vst [vmem:[%s256 + $0x8] sm:$0xff] %v1114
        %s1117 = sand.u32 %s120, 1
        %s1118 = scalar_lea.sflag [#allocation4], %s1117
        %s1119 = sand.u32 %s120, 1
        %s1120 = smul.addr %s1119, 16
        %s1121 = scalar_lea.vmem [#allocation10], %s1120
        // Predicated region
        $region53: #{tpu_custom_call.1} parent=35 // pred_check
          %p1122 = pneg %p130
        $region54: #{tpu_custom_call.1} parent=35 // pred_check_branch
          %1124 = sbr.rel (%p1122) target = $region56
        $region55: #{tpu_custom_call.1} parent=35 // pred_region
          %s1126 = ssub.s32 256, 256
          %1127 = vsyncadd %s1118, %s1126
          %s1128 = smul.addr %s23, 2
          %s1129 = smul.addr %s1128, 128
          %s1130 = scalar_lea.hbm %s4, %s1129
          %s1132 = sshll.u32 %s1121, 4
          %s1133 = int_to_ptr.vmem [resolvable:$true] %s1132
          %1135 = dma.vmem_to_hbm [thread:$0]  %s1133, 256, %s1130, %s1118
        $region56: #{tpu_custom_call.1} parent=35 // pred_fallthru
          _
      $region36: #{tpu_custom_call.1} parent=5 // pred_fallthru
        _
      %p1136 = scmp.le.s32.totalorder 2, %s18
      // Predicated region
      $region57: #{tpu_custom_call.1} parent=5 // pred_check
        %p1137 = pneg %p1136
      $region58: #{tpu_custom_call.1} parent=5 // pred_check_branch
        %1139 = sbr.rel (%p1137) target = $region60
      $region59: #{tpu_custom_call.1} parent=5 // pred_region
        %s1140 = ssub.s32 %s18, 2
        // Predicated region
        $region61: #{tpu_custom_call.1} parent=59 // pred_check
          %p1141 = pneg %p136
        $region62: #{tpu_custom_call.1} parent=59 // pred_check_branch
          %1143 = sbr.rel (%p1141) target = $region64
        $region63: #{tpu_custom_call.1} parent=59 // pred_region
          %s1144 = sand.u32 %s121, 1
          %s1145 = scalar_lea.sflag [#allocation4], %s1144
          %s1146 = sand.u32 %s121, 1
          %s1147 = smul.addr %s1146, 16
          %s1148 = scalar_lea.vmem [#allocation10], %s1147
          %1149 = dma.done %s1145, 256
        $region64: #{tpu_custom_call.1} parent=59 // pred_fallthru
          _
      $region60: #{tpu_custom_call.1} parent=5 // pred_fallthru
        _
    $region6: #{tpu_custom_call.1} parent=1 // loop_footer
      %s22 = sadd.s32 1, %s18
    $region7: #{tpu_custom_call.1} parent=1 // loop_footer_branch
      %17 = sbr.rel target = $region3
    $region8: #{tpu_custom_call.1} parent=1 // loop_exit
      _
    %1150 = vsyncpa [#allocation3], 1
    %s1151 = scalar_lea.sflag [#allocation3], 1
    %1152 = vsyncpa %s1151, 1
    %1153 = vsyncpa [#allocation7], 1
    %1154 = vsyncpa [#allocation4], 1
    %s1155 = scalar_lea.sflag [#allocation4], 1
    %1156 = vsyncpa %s1155, 1
    %1157 = vsyncpa [#allocation5], 1
    %s1158 = scalar_lea.sflag [#allocation5], 1
    %1159 = vsyncpa %s1158, 1

</llo_original>
